<compile_context>
chip_gen: v5e
topology: v5e:2x2
jax: 0.10.0
libtpu: 0.0.40
codegen_flags: <defaults>
</compile_context>

<pallas_src>
import functools

import jax
import jax.numpy as jnp
from jax.experimental import pallas as pl
from jax.experimental.pallas import tpu as pltpu


def _round_up(n: int, m: int) -> int:
    return ((n + m - 1) // m) * m


def _policy_kernel(x_ref, w_enc_ref, b_enc_ref, w_head_ref, b_head_ref, out_ref):
    # Encoder: Linear + ReLU (MXU matmul with f32 accumulation, VPU epilogue).
    h = jnp.dot(x_ref[...], w_enc_ref[...], preferred_element_type=jnp.float32)
    h = jnp.maximum(h + b_enc_ref[...], 0.0)            # (TB, 32) + (1, 32)
    # Head: Linear -> logits.
    logits = jnp.dot(h.astype(w_head_ref.dtype), w_head_ref[...],
                     preferred_element_type=jnp.float32)
    out_ref[...] = (logits + b_head_ref[...]).astype(out_ref.dtype)


@functools.partial(jax.jit, static_argnames=("block_b", "io_dtype"))
def discrete_policy_forward(
    x: jax.Array,          # (B, obs_shape)
    w_enc: jax.Array,      # (obs_shape, 32)
    b_enc: jax.Array,      # (32,)
    w_head: jax.Array,     # (32, action_shape)
    b_head: jax.Array,     # (action_shape,)
    *,
    block_b: int = 2048,
    io_dtype=None,         # e.g. jnp.bfloat16 to halve x/logit HBM bytes
) -> jax.Array:
    B, obs = x.shape
    hidden = w_enc.shape[1]
    act = w_head.shape[1]

    if io_dtype is not None:
        x = x.astype(io_dtype)
        w_enc = w_enc.astype(io_dtype)
        w_head = w_head.astype(io_dtype)
    out_dtype = x.dtype

    # Batch tile: multiple of 8 (f32 sublane granularity), capped at block_b.
    tb = min(block_b, _round_up(B, 8))
    b_pad = _round_up(B, tb)
    if b_pad != B:
        x = jnp.pad(x, ((0, b_pad - B), (0, 0)))

    # One-time (traced once under jit) bias reshapes for 2-D broadcast in VMEM.
    b_enc2 = b_enc.reshape(1, hidden).astype(jnp.float32)
    b_head2 = b_head.reshape(1, act).astype(jnp.float32)

    grid = (pl.cdiv(b_pad, tb),)

    out = pl.pallas_call(
        _policy_kernel,
        out_shape=jax.ShapeDtypeStruct((b_pad, act), out_dtype),
        grid=grid,
        in_specs=[
            # Activations: tiled over batch, pipelined / double-buffered.
            pl.BlockSpec((tb, obs), lambda i: (i, 0)),
            # Parameters: constant block index -> stay resident in VMEM.
            pl.BlockSpec((obs, hidden), lambda i: (0, 0)),
            pl.BlockSpec((1, hidden), lambda i: (0, 0)),
            pl.BlockSpec((hidden, act), lambda i: (0, 0)),
            pl.BlockSpec((1, act), lambda i: (0, 0)),
        ],
        out_specs=pl.BlockSpec((tb, act), lambda i: (i, 0)),
        compiler_params=pltpu.CompilerParams(
            dimension_semantics=("parallel",),   # shard batch across TCs (v7x)
        ),
    )(x, w_enc, b_enc2, w_head, b_head2)

    return out[:B]


def init_params(key, obs_shape: int, action_shape: int, hidden: int = 32):
    """Deterministic PyTorch-Linear-style init (uniform +/- 1/sqrt(fan_in))."""
    k0, k1, k2, k3 = jax.random.split(key, 4)
    bound_e = 1.0 / jnp.sqrt(obs_shape)
    w_enc = jax.random.uniform(k0, (obs_shape, hidden), jnp.float32,
                               -bound_e, bound_e)
    b_enc = jax.random.uniform(k1, (hidden,), jnp.float32, -bound_e, bound_e)
    bound_h = 1.0 / jnp.sqrt(hidden)
    w_head = jax.random.uniform(k2, (hidden, action_shape), jnp.float32,
                                -bound_h, bound_h)
    b_head = jax.random.uniform(k3, (action_shape,), jnp.float32,
                                -bound_h, bound_h)
    return w_enc, b_enc, w_head, b_head


if __name__ == "__main__":
    obs_shape = 16
    action_shape = 6
    batch = 4          # small demo shape; real wins appear at B in the 100s-1000s

    key = jax.random.PRNGKey(0)
    k_x, k_p = jax.random.split(key)
    x = jax.random.normal(k_x, (batch, obs_shape), dtype=jnp.float32)

    w_enc, b_enc, w_head, b_head = init_params(k_p, obs_shape, action_shape)

    logit = discrete_policy_forward(x, w_enc, b_enc, w_head, b_head)
    logit = jax.block_until_ready(logit)

    # Cross-check against a pure-JAX reference of the PyTorch forward.
    h_ref = jnp.maximum(x @ w_enc + b_enc, 0.0)
    ref = h_ref @ w_head + b_head
    assert logit.shape == (batch, action_shape), logit.shape
    assert jnp.allclose(logit, ref, atol=1e-5, rtol=1e-5)

    print("KERNEL_OK")
</pallas_src>

<mosaic_0001>
module attributes {stable_mosaic.version = 11 : i64} {
  func.func @_policy_kernel(%arg0: i32, %arg1: memref<8x16xf32, #tpu.memory_space<vmem>>, %arg2: memref<16x32xf32, #tpu.memory_space<vmem>>, %arg3: memref<1x32xf32, #tpu.memory_space<vmem>>, %arg4: memref<32x6xf32, #tpu.memory_space<vmem>>, %arg5: memref<1x6xf32, #tpu.memory_space<vmem>>, %arg6: memref<8x6xf32, #tpu.memory_space<vmem>>) attributes {dimension_semantics = [#tpu.dimension_semantics<parallel>], iteration_bounds = array<i64: 1>, scalar_prefetch = 0 : i64, scratch_operands = 0 : i64, tpu.core_type = #tpu.core_type<tc>, window_params = [{transform_indices = @transform_0, window_bounds = array<i64: 8, 16>}, {pipeline_mode = #tpu.pipeline_mode<synchronous>, transform_indices = @transform_1, window_bounds = array<i64: 16, 32>}, {pipeline_mode = #tpu.pipeline_mode<synchronous>, transform_indices = @transform_2, window_bounds = array<i64: 1, 32>}, {pipeline_mode = #tpu.pipeline_mode<synchronous>, transform_indices = @transform_3, window_bounds = array<i64: 32, 6>}, {pipeline_mode = #tpu.pipeline_mode<synchronous>, transform_indices = @transform_4, window_bounds = array<i64: 1, 6>}, {transform_indices = @transform_5, window_bounds = array<i64: 8, 6>}]} {
    %c0 = arith.constant 0 : index
    %c0_0 = arith.constant 0 : index
    %0 = vector.load %arg1[%c0, %c0_0] : memref<8x16xf32, #tpu.memory_space<vmem>>, vector<8x16xf32>
    %c0_1 = arith.constant 0 : index
    %c0_2 = arith.constant 0 : index
    %1 = vector.load %arg2[%c0_1, %c0_2] : memref<16x32xf32, #tpu.memory_space<vmem>>, vector<16x32xf32>
    %cst = arith.constant dense<0.000000e+00> : vector<8x32xf32>
    %2 = tpu.matmul %0, %1, %cst {dimension_numbers = #tpu.dot_dimension_numbers<[1], [0], [0], [1], [0, 0, 1, 1], [], []>} : vector<8x16xf32>, vector<16x32xf32>, vector<8x32xf32> -> vector<8x32xf32>
    %c0_3 = arith.constant 0 : index
    %c0_4 = arith.constant 0 : index
    %3 = vector.load %arg3[%c0_3, %c0_4] : memref<1x32xf32, #tpu.memory_space<vmem>>, vector<1x32xf32>
    %4 = vector.broadcast %3 : vector<1x32xf32> to vector<8x32xf32>
    %5 = arith.addf %2, %4 : vector<8x32xf32>
    %cst_5 = arith.constant 0.000000e+00 : f32
    %6 = vector.broadcast %cst_5 : f32 to vector<8x32xf32>
    %7 = arith.maximumf %5, %6 : vector<8x32xf32>
    %c0_6 = arith.constant 0 : index
    %c0_7 = arith.constant 0 : index
    %8 = vector.load %arg4[%c0_6, %c0_7] : memref<32x6xf32, #tpu.memory_space<vmem>>, vector<32x6xf32>
    %cst_8 = arith.constant dense<0.000000e+00> : vector<8x6xf32>
    %9 = tpu.matmul %7, %8, %cst_8 {dimension_numbers = #tpu.dot_dimension_numbers<[1], [0], [0], [1], [0, 0, 1, 1], [], []>} : vector<8x32xf32>, vector<32x6xf32>, vector<8x6xf32> -> vector<8x6xf32>
    %c0_9 = arith.constant 0 : index
    %c0_10 = arith.constant 0 : index
    %10 = vector.load %arg5[%c0_9, %c0_10] : memref<1x6xf32, #tpu.memory_space<vmem>>, vector<1x6xf32>
    %11 = vector.broadcast %10 : vector<1x6xf32> to vector<8x6xf32>
    %12 = arith.addf %9, %11 : vector<8x6xf32>
    %c0_11 = arith.constant 0 : index
    %c0_12 = arith.constant 0 : index
    %13 = vector.load %arg6[%c0_11, %c0_12] : memref<8x6xf32, #tpu.memory_space<vmem>>, vector<8x6xf32>
    tpu.vector_store %arg6[%c0_11, %c0_12], %12 {strides = array<i32>} : memref<8x6xf32, #tpu.memory_space<vmem>>, vector<8x6xf32>,
    return
  }
  func.func @transform_0(%arg0: i32) -> (i32, i32) {
    %c0_i32 = arith.constant 0 : i32
    %c0_i32_0 = arith.constant 0 : i32
    return %arg0, %c0_i32 : i32, i32
  }
  func.func @transform_1(%arg0: i32) -> (i32, i32) {
    %c0_i32 = arith.constant 0 : i32
    %c0_i32_0 = arith.constant 0 : i32
    %c0_i32_1 = arith.constant 0 : i32
    return %c0_i32, %c0_i32_0 : i32, i32
  }
  func.func @transform_2(%arg0: i32) -> (i32, i32) {
    %c0_i32 = arith.constant 0 : i32
    %c0_i32_0 = arith.constant 0 : i32
    %c0_i32_1 = arith.constant 0 : i32
    return %c0_i32, %c0_i32_0 : i32, i32
  }
  func.func @transform_3(%arg0: i32) -> (i32, i32) {
    %c0_i32 = arith.constant 0 : i32
    %c0_i32_0 = arith.constant 0 : i32
    %c0_i32_1 = arith.constant 0 : i32
    return %c0_i32, %c0_i32_0 : i32, i32
  }
  func.func @transform_4(%arg0: i32) -> (i32, i32) {
    %c0_i32 = arith.constant 0 : i32
    %c0_i32_0 = arith.constant 0 : i32
    %c0_i32_1 = arith.constant 0 : i32
    return %c0_i32, %c0_i32_0 : i32, i32
  }
  func.func @transform_5(%arg0: i32) -> (i32, i32) {
    %c0_i32 = arith.constant 0 : i32
    %c0_i32_0 = arith.constant 0 : i32
    return %arg0, %c0_i32 : i32, i32
  }
}

</mosaic_0001>

<llo_original>
// kernel: discrete_policy_forward.1
$region0: #{discrete_policy_forward.1}
  #allocation0 [shape = 'u32[]', space=smem, size = 0x4, offset = 0x4, fixed_abs, tag = 'smem constant byte address 0x4 - core index']
  #allocation1 [shape = 'u32[72,128]{1,0:T(1,128)}', space=vmem, size = 0x9000, scoped, tag = 'internal scratch']
  %s0 = inlined_call_operand.vmem [shape: f32[8,16], index: 0, kind: input, shape index: {}]
  %s1 = inlined_call_operand.vmem [shape: f32[16,32], index: 1, kind: input, shape index: {}]
  %s2 = inlined_call_operand.vmem [shape: f32[1,32], index: 2, kind: input, shape index: {}]
  %s3 = inlined_call_operand.vmem [shape: f32[32,6], index: 3, kind: input, shape index: {}]
  %s4 = inlined_call_operand.vmem [shape: f32[1,6], index: 4, kind: input, shape index: {}]
  %s5 = inlined_call_operand.vmem [shape: f32[8,6], index: 5, kind: output, shape index: {}]
  %s6 = sld [smem:[#allocation0]]
  $region30: #{discrete_policy_forward.1} parent=0
    _
  %s8 = ssub.s32 1, %s6
  %s9 = scalar_select 0, %s8, %s6
  // Predicated region
  $region2: #{discrete_policy_forward.1} parent=0 // pred_check
    _
  $region3: #{discrete_policy_forward.1} parent=0 // pred_check_branch
    %11 = sbr.rel (0) target = $region5
  $region4: #{discrete_policy_forward.1} parent=0 // pred_region
    _
  $region5: #{discrete_policy_forward.1} parent=0 // pred_fallthru
    _
  // Predicated region
  $region6: #{discrete_policy_forward.1} parent=0 // pred_check
    _
  $region7: #{discrete_policy_forward.1} parent=0 // pred_check_branch
    %13 = sbr.rel (0) target = $region9
  $region8: #{discrete_policy_forward.1} parent=0 // pred_region
    _
  $region9: #{discrete_policy_forward.1} parent=0 // pred_fallthru
    _
  // Predicated region
  $region10: #{discrete_policy_forward.1} parent=0 // pred_check
    _
  $region11: #{discrete_policy_forward.1} parent=0 // pred_check_branch
    %15 = sbr.rel (0) target = $region13
  $region12: #{discrete_policy_forward.1} parent=0 // pred_region
    _
  $region13: #{discrete_policy_forward.1} parent=0 // pred_fallthru
    _
  // Predicated region
  $region14: #{discrete_policy_forward.1} parent=0 // pred_check
    _
  $region15: #{discrete_policy_forward.1} parent=0 // pred_check_branch
    %17 = sbr.rel (0) target = $region17
  $region16: #{discrete_policy_forward.1} parent=0 // pred_region
    _
  $region17: #{discrete_policy_forward.1} parent=0 // pred_fallthru
    _
  // Predicated region
  $region18: #{discrete_policy_forward.1} parent=0 // pred_check
    _
  $region19: #{discrete_policy_forward.1} parent=0 // pred_check_branch
    %19 = sbr.rel (0) target = $region21
  $region20: #{discrete_policy_forward.1} parent=0 // pred_region
    _
  $region21: #{discrete_policy_forward.1} parent=0 // pred_fallthru
    _
  %v20 = vld [vmem:[%s0] sm:$0xff]
  %v21 = vld [vmem:[%s1] sm:$0xff]
  %v22 = vld [vmem:[%s1 + $0x8] sm:$0xff]
  %v23 = vld [vmem:[%s2] sm:$0x1]
  %v25 = vperm.slane %v23, 0
  %vm27 = vcmask 130048
  %v29 = vsel %vm27, %v20, 0
  %31 = vmatpush.msra.mxu0 0.0
  %32 = vmatpush.msra.mxu0 0.0
  %33 = vmatpush.msra.mxu0 0.0
  %34 = vmatpush.msra.mxu0 0.0
  %35 = vmatpush.msra.mxu0 0.0
  %36 = vmatpush.msra.mxu0 0.0
  %37 = vmatpush.msra.mxu0 0.0
  %38 = vmatpush.msra.mxu0 0.0
  %39 = vmatpush.msra.mxu0 0.0
  %40 = vmatpush.msra.mxu0 0.0
  %41 = vmatpush.msra.mxu0 0.0
  %42 = vmatpush.msra.mxu0 0.0
  %43 = vmatpush.msra.mxu0 0.0
  %44 = vmatpush.msra.mxu0 0.0
  %45 = vmatpush.msra.mxu0 %v22
  %46 = vmatpush.msra.mxu0 %v21
  %47 = vmatmul.f32.gmra.mxu0 %v29
  %v48 = vpop.f32.mrf.mxu0
  %v49 = vadd.f32 %v25, %v48
  %50 = vdwg.mxu0
  %v51 = vmax.f32 %v49, 0.0
  %v52 = vld [vmem:[%s3] sm:$0xff]
  %v53 = vld [vmem:[%s3 + $0x8] sm:$0xff]
  %v54 = vld [vmem:[%s3 + $0x10] sm:$0xff]
  %v55 = vld [vmem:[%s3 + $0x18] sm:$0xff]
  %v56 = vld [vmem:[%s4] sm:$0x1]
  %v58 = vperm.slane %v56, 0
  %vm60 = vcmask 261120
  %v62 = vsel %vm60, %v51, 0
  %64 = vmatpush.msra.mxu0 0.0
  %65 = vmatpush.msra.mxu0 0.0
  %66 = vmatpush.msra.mxu0 0.0
  %67 = vmatpush.msra.mxu0 0.0
  %68 = vmatpush.msra.mxu0 0.0
  %69 = vmatpush.msra.mxu0 0.0
  %70 = vmatpush.msra.mxu0 0.0
  %71 = vmatpush.msra.mxu0 0.0
  %72 = vmatpush.msra.mxu0 0.0
  %73 = vmatpush.msra.mxu0 0.0
  %74 = vmatpush.msra.mxu0 0.0
  %75 = vmatpush.msra.mxu0 0.0
  %76 = vmatpush.msra.mxu0 %v55
  %77 = vmatpush.msra.mxu0 %v54
  %78 = vmatpush.msra.mxu0 %v53
  %79 = vmatpush.msra.mxu0 %v52
  %80 = vmatmul.f32.gmra.mxu0 %v62
  %v81 = vpop.f32.mrf.mxu0
  %v82 = vadd.f32 %v58, %v81
  %83 = vdwg.mxu0
  %vm84 = vcmask 48128
  %85 = vst.msk [vmem:[%s5] sm:$0xff] %vm84, %v82
  // Predicated region
  $region22: #{discrete_policy_forward.1} parent=0 // pred_check
    _
  $region23: #{discrete_policy_forward.1} parent=0 // pred_check_branch
    %87 = sbr.rel (0) target = $region25
  $region24: #{discrete_policy_forward.1} parent=0 // pred_region
    _
  $region25: #{discrete_policy_forward.1} parent=0 // pred_fallthru
    _
  // Predicated region
  $region26: #{discrete_policy_forward.1} parent=0 // pred_check
    _
  $region27: #{discrete_policy_forward.1} parent=0 // pred_check_branch
    %89 = sbr.rel (0) target = $region29
  $region28: #{discrete_policy_forward.1} parent=0 // pred_region
    _
  $region29: #{discrete_policy_forward.1} parent=0 // pred_fallthru
    _

</llo_original>
